<compile_context>
chip_gen: v5e
topology: v5e:2x2
jax: 0.10.0
libtpu: 0.0.40
codegen_flags: <defaults>
</compile_context>

<pallas_src>
import math
import functools

import jax
import jax.numpy as jnp
from jax.experimental import pallas as pl
from jax.experimental.pallas import tpu as pltpu

# ----------------------- small ResNeXt configuration ------------------------
CARDINALITY = 8          # convolution groups
BASE_WIDTH = 4
LAYERS = (1, 1, 1, 1)    # one Bottleneck per stage (small, but same semantics)
NUM_CLASSES = 10
EXPANSION = 4
BN_EPS = 1e-5


def _pick_tile(m, cap=512):
    """Largest row tile <= cap that divides m (multiple of 8), else m itself."""
    for t in (512, 256, 128, 64, 32, 16, 8):
        if t <= cap and t <= m and m % t == 0:
            return t
    return m


# ------------------------------ Pallas kernels -------------------------------
def _mm_bias_kernel(a_ref, w_ref, b_ref, o_ref, *, relu):
    # a: (TM, K) bf16   w: (K, N) bf16   b: (1, N) f32   o: (TM, N)
    acc = jnp.dot(a_ref[...], w_ref[...], preferred_element_type=jnp.float32)
    out = acc + b_ref[...]
    if relu:
        out = jnp.maximum(out, 0.0)
    o_ref[...] = out.astype(o_ref.dtype)


def _mm_bias_res_kernel(a_ref, w_ref, b_ref, r_ref, o_ref, *, relu):
    # same as above plus a fused residual add (residual kept bf16 in HBM,
    # added in f32 in the epilogue).
    acc = jnp.dot(a_ref[...], w_ref[...], preferred_element_type=jnp.float32)
    out = acc + b_ref[...] + r_ref[...].astype(jnp.float32)
    if relu:
        out = jnp.maximum(out, 0.0)
    o_ref[...] = out.astype(o_ref.dtype)


def fused_matmul(a, w, bias, *, relu, residual=None, out_dtype=jnp.bfloat16):
    """(M,K)@(K,N) + bias [+ residual] [+ ReLU], row-tiled, bf16 MXU / f32 acc."""
    M, K = a.shape
    N = w.shape[1]
    TM = _pick_tile(M)
    grid = (M // TM,)

    a = a.astype(jnp.bfloat16)
    w = w.astype(jnp.bfloat16)
    bias2 = bias.reshape(1, N).astype(jnp.float32)

    in_specs = [
        pl.BlockSpec((TM, K), lambda m: (m, 0)),
        pl.BlockSpec((K, N), lambda m: (0, 0)),   # weight resident across M tiles
        pl.BlockSpec((1, N), lambda m: (0, 0)),
    ]
    args = [a, w, bias2]
    if residual is not None:
        in_specs.append(pl.BlockSpec((TM, N), lambda m: (m, 0)))
        args.append(residual.astype(jnp.bfloat16))
        kernel = functools.partial(_mm_bias_res_kernel, relu=relu)
    else:
        kernel = functools.partial(_mm_bias_kernel, relu=relu)

    return pl.pallas_call(
        kernel,
        out_shape=jax.ShapeDtypeStruct((M, N), out_dtype),
        grid=grid,
        in_specs=in_specs,
        out_specs=pl.BlockSpec((TM, N), lambda m: (m, 0)),
        # NOTE: no vmem_limit_bytes — block footprint is a few MiB, well under
        # the scoped default on v5e/v6e/v7x (v7x physical VMEM is only 64 MiB).
        compiler_params=pltpu.CompilerParams(
            dimension_semantics=("parallel",)),
    )(*args)


def _max9_kernel(*refs):
    *in_refs, o_ref = refs
    m = in_refs[0][...]
    for r in in_refs[1:]:
        m = jnp.maximum(m, r[...])
    o_ref[...] = m


def _mean_reduce_kernel(x_ref, o_ref):
    # x: (N, H*W, C) bf16 -> global average pool in f32 -> (N, C) f32
    o_ref[...] = jnp.mean(x_ref[...].astype(jnp.float32), axis=1)


# ------------------------------ glue (plain JAX) ------------------------------
def extract_patches(x, kh, kw, stride, dilation, padding):
    """x: (N,H,W,C) -> (N,Ho,Wo, kh*kw*C); last dim ordered (kh, kw, C)."""
    N, H, W, C = x.shape
    xp = jnp.pad(x, ((0, 0), (padding, padding), (padding, padding), (0, 0)))
    Hp, Wp = H + 2 * padding, W + 2 * padding
    Ho = (Hp - dilation * (kh - 1) - 1) // stride + 1
    Wo = (Wp - dilation * (kw - 1) - 1) // stride + 1
    cols = []
    for i in range(kh):
        for j in range(kw):
            rs, cs = i * dilation, j * dilation
            cols.append(xp[:, rs:rs + (Ho - 1) * stride + 1:stride,
                              cs:cs + (Wo - 1) * stride + 1:stride, :])
    return jnp.concatenate(cols, axis=-1), Ho, Wo


def conv_bn_act(x, p, *, stride=1, padding=0, relu=True, residual=None):
    """Conv2d(bias=False) + folded eval-mode BN [+ residual] [+ ReLU].

    x: (N,H,W,Cin) bf16.  p['wmat'] is the dense matmul weight (K, Cout) bf16
    with the BN scale already folded in; p['bias'] is the folded BN bias (f32).
    Grouped convs are already encoded as a block-diagonal wmat, so K uses the
    natural (kh, kw, Cin) patch ordering — no activation regrouping needed.
    """
    N, H, W, Cin = x.shape
    k = p["k"]
    if k == 1:
        xs = x[:, ::stride, ::stride, :] if stride > 1 else x
        Ho, Wo = xs.shape[1], xs.shape[2]
        a = xs.reshape(N * Ho * Wo, Cin)
    else:
        patches, Ho, Wo = extract_patches(x, k, k, stride, 1, padding)
        a = patches.reshape(N * Ho * Wo, k * k * Cin)
    Cout = p["wmat"].shape[1]
    r = None if residual is None else residual.reshape(N * Ho * Wo, Cout)
    out = fused_matmul(a, p["wmat"], p["bias"], relu=relu, residual=r)
    return out.reshape(N, Ho, Wo, Cout)


def maxpool_3x3_s2_p1(x):
    N, H, W, C = x.shape
    k, s, pad = 3, 2, 1
    xp = jnp.pad(x, ((0, 0), (pad, pad), (pad, pad), (0, 0)),
                 constant_values=-jnp.inf)   # padded taps never win the max
    Ho = (H + 2 * pad - k) // s + 1
    Wo = (W + 2 * pad - k) // s + 1
    M = N * Ho * Wo
    # 9 taps passed as separate row-tiled inputs (no 9x stacked HBM tensor).
    taps = [xp[:, i:i + (Ho - 1) * s + 1:s, j:j + (Wo - 1) * s + 1:s, :]
            .reshape(M, C)
            for i in range(k) for j in range(k)]
    TM = _pick_tile(M)
    out = pl.pallas_call(
        _max9_kernel,
        out_shape=jax.ShapeDtypeStruct((M, C), x.dtype),
        grid=(M // TM,),
        in_specs=[pl.BlockSpec((TM, C), lambda m: (m, 0)) for _ in range(k * k)],
        out_specs=pl.BlockSpec((TM, C), lambda m: (m, 0)),
        compiler_params=pltpu.CompilerParams(
            dimension_semantics=("parallel",)),
    )(*taps)
    return out.reshape(N, Ho, Wo, C)


def global_avg_pool(x):
    # Tiny tensor at this point (N, H*W, C); whole-array kernel is fine.
    N, H, W, C = x.shape
    return pl.pallas_call(
        _mean_reduce_kernel,
        out_shape=jax.ShapeDtypeStruct((N, C), jnp.float32),
    )(x.reshape(N, H * W, C))


def bottleneck(x, p, *, stride):
    out = conv_bn_act(x, p["conv1"], relu=True)
    out = conv_bn_act(out, p["conv2"], stride=stride, padding=1, relu=True)
    if "down" in p:
        residual = conv_bn_act(x, p["down"], stride=stride, relu=False)
    else:
        residual = x
    # conv3 + BN3 + residual add + ReLU fused into one matmul epilogue.
    return conv_bn_act(out, p["conv3"], relu=True, residual=residual)


def resnext_forward(x_nchw, params):
    x = jnp.transpose(x_nchw, (0, 2, 3, 1)).astype(jnp.bfloat16)  # NCHW -> NHWC
    # stem: 7x7 s2 conv + BN + ReLU, then 3x3 s2 maxpool
    x = conv_bn_act(x, params["stem"], stride=2, padding=3, relu=True)
    x = maxpool_3x3_s2_p1(x)
    for stage in params["stages"]:
        for bi, blk in enumerate(stage["blocks"]):
            s = stage["stride"] if bi == 0 else 1
            x = bottleneck(x, blk, stride=s)
    feat = global_avg_pool(x)                       # (N, 512 * expansion) f32
    return fused_matmul(feat, params["fc_wmat"], params["fc_b"],
                        relu=False, out_dtype=jnp.float32)


# ------------------------- deterministic parameter init -----------------------
def _kaiming(key, cout, cin_pg, kh, kw):
    fan_out = cout * kh * kw
    std = math.sqrt(2.0 / fan_out)
    return std * jax.random.normal(key, (cout, cin_pg, kh, kw), jnp.float32)


def _bn_fold(c):
    # eval-mode BatchNorm with fresh-module buffers: gamma=1, beta=0, mean=0, var=1
    gamma = jnp.ones((c,), jnp.float32)
    beta = jnp.zeros((c,), jnp.float32)
    mean = jnp.zeros((c,), jnp.float32)
    var = jnp.ones((c,), jnp.float32)
    scale = gamma / jnp.sqrt(var + BN_EPS)
    bias = beta - mean * scale
    return scale, bias


def _dense_weight(w, groups):
    """Torch conv weight (Cout, Cin/G, kh, kw) -> dense (kh*kw*Cin, Cout).

    For grouped convs the result is block-diagonal over channel groups so a
    single lane-dense matmul implements the grouped conv (K ordered kh,kw,Cin
    with PyTorch contiguous-group channel layout).
    """
    cout, cin_pg, kh, kw = w.shape
    g = groups
    cout_pg = cout // g
    wt = w.reshape(g, cout_pg, cin_pg, kh, kw).transpose(3, 4, 0, 2, 1)
    eye = jnp.eye(g, dtype=w.dtype)
    wbd = jnp.einsum("ijgco,gh->ijgcho", wt, eye)      # (kh,kw,G,Cin_pg,G,Cout_pg)
    return wbd.reshape(kh * kw * g * cin_pg, cout)


def _conv_bn(key, cout, cin, k, groups=1):
    w = _kaiming(key, cout, cin // groups, k, k)       # PyTorch layout
    scale, bias = _bn_fold(cout)
    wmat = _dense_weight(w, groups) * scale[None, :]   # fold BN scale into weights
    return {"wmat": wmat.astype(jnp.bfloat16), "bias": bias, "k": k}


def make_params(key):
    ki = iter(jax.random.split(key, 32))
    params = {"stem": _conv_bn(next(ki), 64, 3, 7)}
    inplanes = 64
    stages = []
    for planes, blocks, stride in zip((64, 128, 256, 512), LAYERS, (1, 2, 2, 2)):
        D = int(math.floor(planes * (BASE_WIDTH / 64.0)))
        DC = D * CARDINALITY
        stage = {"stride": stride, "blocks": []}
        for bi in range(blocks):
            s = stride if bi == 0 else 1
            blk = {
                "conv1": _conv_bn(next(ki), DC, inplanes, 1),
                "conv2": _conv_bn(next(ki), DC, DC, 3, groups=CARDINALITY),
                # TODO(synk): _init_weights zero-inits the last BN gamma per block;
                # kept at 1 here so the main path is numerically exercised.
                "conv3": _conv_bn(next(ki), planes * EXPANSION, DC, 1),
            }
            if s != 1 or inplanes != planes * EXPANSION:
                blk["down"] = _conv_bn(next(ki), planes * EXPANSION, inplanes, 1)
            inplanes = planes * EXPANSION
            stage["blocks"].append(blk)
        stages.append(stage)
    params["stages"] = stages
    fc_w = 1e-4 * jax.random.normal(next(ki), (NUM_CLASSES, 512 * EXPANSION),
                                    jnp.float32)
    params["fc_wmat"] = jnp.transpose(fc_w).astype(jnp.bfloat16)  # (Cin, Cout)
    params["fc_b"] = jnp.zeros((NUM_CLASSES,), jnp.float32)
    return params


if __name__ == "__main__":
    key = jax.random.PRNGKey(0)
    pkey, xkey = jax.random.split(key)
    params = make_params(pkey)
    # PyTorch-style NCHW input
    x = jax.random.normal(xkey, (2, 3, 64, 64), jnp.float32)
    logits = resnext_forward(x, params)
    logits = jax.block_until_ready(logits)
    assert logits.shape == (2, NUM_CLASSES), logits.shape
    assert bool(jnp.all(jnp.isfinite(logits)))
    print("KERNEL_OK")
</pallas_src>

<mosaic_0001>
module attributes {stable_mosaic.version = 11 : i64} {
  func.func @_mm_bias_kernel(%arg0: i32, %arg1: memref<512x147xbf16, #tpu.memory_space<vmem>>, %arg2: memref<147x64xbf16, #tpu.memory_space<vmem>>, %arg3: memref<1x64xf32, #tpu.memory_space<vmem>>, %arg4: memref<512x64xbf16, #tpu.memory_space<vmem>>) attributes {dimension_semantics = [#tpu.dimension_semantics<parallel>], iteration_bounds = array<i64: 4>, scalar_prefetch = 0 : i64, scratch_operands = 0 : i64, tpu.core_type = #tpu.core_type<tc>, window_params = [{transform_indices = @transform_0, window_bounds = array<i64: 512, 147>}, {pipeline_mode = #tpu.pipeline_mode<synchronous>, transform_indices = @transform_1, window_bounds = array<i64: 147, 64>}, {pipeline_mode = #tpu.pipeline_mode<synchronous>, transform_indices = @transform_2, window_bounds = array<i64: 1, 64>}, {transform_indices = @transform_3, window_bounds = array<i64: 512, 64>}]} {
    %c0 = arith.constant 0 : index
    %c0_0 = arith.constant 0 : index
    %0 = vector.load %arg1[%c0, %c0_0] : memref<512x147xbf16, #tpu.memory_space<vmem>>, vector<512x147xbf16>
    %c0_1 = arith.constant 0 : index
    %c0_2 = arith.constant 0 : index
    %1 = vector.load %arg2[%c0_1, %c0_2] : memref<147x64xbf16, #tpu.memory_space<vmem>>, vector<147x64xbf16>
    %cst = arith.constant dense<0.000000e+00> : vector<512x64xf32>
    %2 = tpu.matmul %0, %1, %cst {dimension_numbers = #tpu.dot_dimension_numbers<[1], [0], [0], [1], [0, 0, 1, 1], [], []>} : vector<512x147xbf16>, vector<147x64xbf16>, vector<512x64xf32> -> vector<512x64xf32>
    %c0_3 = arith.constant 0 : index
    %c0_4 = arith.constant 0 : index
    %3 = vector.load %arg3[%c0_3, %c0_4] : memref<1x64xf32, #tpu.memory_space<vmem>>, vector<1x64xf32>
    %4 = vector.broadcast %3 : vector<1x64xf32> to vector<512x64xf32>
    %5 = arith.addf %2, %4 : vector<512x64xf32>
    %cst_5 = arith.constant 0.000000e+00 : f32
    %6 = vector.broadcast %cst_5 : f32 to vector<512x64xf32>
    %7 = arith.maximumf %5, %6 : vector<512x64xf32>
    %8 = arith.truncf %7 : vector<512x64xf32> to vector<512x64xbf16>
    %c0_6 = arith.constant 0 : index
    %c0_7 = arith.constant 0 : index
    %9 = vector.load %arg4[%c0_6, %c0_7] : memref<512x64xbf16, #tpu.memory_space<vmem>>, vector<512x64xbf16>
    tpu.vector_store %arg4[%c0_6, %c0_7], %8 {strides = array<i32>} : memref<512x64xbf16, #tpu.memory_space<vmem>>, vector<512x64xbf16>,
    return
  }
  func.func @transform_0(%arg0: i32) -> (i32, i32) {
    %c0_i32 = arith.constant 0 : i32
    %c0_i32_0 = arith.constant 0 : i32
    return %arg0, %c0_i32 : i32, i32
  }
  func.func @transform_1(%arg0: i32) -> (i32, i32) {
    %c0_i32 = arith.constant 0 : i32
    %c0_i32_0 = arith.constant 0 : i32
    %c0_i32_1 = arith.constant 0 : i32
    return %c0_i32, %c0_i32_0 : i32, i32
  }
  func.func @transform_2(%arg0: i32) -> (i32, i32) {
    %c0_i32 = arith.constant 0 : i32
    %c0_i32_0 = arith.constant 0 : i32
    %c0_i32_1 = arith.constant 0 : i32
    return %c0_i32, %c0_i32_0 : i32, i32
  }
  func.func @transform_3(%arg0: i32) -> (i32, i32) {
    %c0_i32 = arith.constant 0 : i32
    %c0_i32_0 = arith.constant 0 : i32
    return %arg0, %c0_i32 : i32, i32
  }
}

</mosaic_0001>

<llo_original>
// kernel: tpu_custom_call.1
$region0: #{tpu_custom_call.1}
  #allocation0 [shape = 'u32[]', space=smem, size = 0x4, offset = 0x4, fixed_abs, tag = 'smem constant byte address 0x4 - core index']
  #allocation1 [shape = 'u32[72,128]{1,0:T(1,128)}', space=vmem, size = 0x9000, scoped, tag = 'internal scratch']
  %s0 = inlined_call_operand.vmem [shape: bf16[2048,147], index: 0, kind: input, shape index: {}]
  %s1 = inlined_call_operand.vmem [shape: bf16[147,64], index: 1, kind: input, shape index: {}]
  %s2 = inlined_call_operand.vmem [shape: f32[1,64], index: 2, kind: input, shape index: {}]
  %s3 = inlined_call_operand.vmem [shape: bf16[2048,64], index: 3, kind: output, shape index: {}]
  %s4 = sld [smem:[#allocation0]]
  $region45: #{tpu_custom_call.1} parent=0
    _
  %s6 = ssub.s32 1, %s4
  %s7 = scalar_select 0, %s6, %s4
  loop: start=0, step=1, limit=6
  $region2: #{tpu_custom_call.1} parent=0 // loop_pre_header
    _
  $region3: #{tpu_custom_call.1} parent=0 // loop_header
    %s9 = sphi 0, %s13
    %p10 = scmp.ge.s32.totalorder %s9, 6
    %s19 = sphi 0, %s21
    %s22 = sphi 0, %s19
    %s23 = sphi 0, %s22
    %s39 = sphi 0, %s23
    %s43 = sphi 0, %s43
    %s45 = sphi 0, %s43
    %s46 = sphi 0, %s45
    %s60 = sphi 0, %s46
    %s64 = sphi 0, %s64
    %s66 = sphi 0, %s64
    %s67 = sphi 0, %s66
    %s81 = sphi 0, %s67
    %s87 = sphi 0, %s89
    %s90 = sphi 0, %s87
    %s91 = sphi 0, %s90
    %s107 = sphi 0, %s91
  $region4: #{tpu_custom_call.1} parent=0 // loop_header_branch
    %12 = sbr.rel (%p10) target = $region8
  $region5: #{tpu_custom_call.1} parent=0 // loop_body
    %s14 = ssub.s32 %s9, 1
    %s15 = ssub.s32 %s9, 2
    %s16 = sadd.s32 %s9, 1
    %s17 = ssub.s32 %s9, %s16
    %p18 = scmp.eq.s32.totalorder %s17, 0
    %s20 = sadd.s32 %s19, 1
    %s21 = scalar_select %p18, %s19, %s20
    %p24 = pneg %p18
    %p25 = scmp.eq.s32.totalorder %s9, 3
    %p26 = por %p24, %p25
    %p27 = scmp.ne.s32.totalorder %s19, %s22
    %p28 = scmp.eq.s32.totalorder %s9, 0
    %p29 = por %p27, %p28
    %p30 = scmp.ne.s32.totalorder %s19, %s22
    %p31 = scmp.eq.s32.totalorder %s14, 3
    %p32 = por %p30, %p31
    %p33 = scmp.ne.s32.totalorder %s22, %s23
    %p34 = scmp.eq.s32.totalorder %s14, 0
    %p35 = por %p33, %p34
    %p36 = scmp.ne.s32.totalorder %s22, %s23
    %p37 = scmp.eq.s32.totalorder %s15, 3
    %p38 = por %p36, %p37
    %p40 = scmp.ne.s32.totalorder %s23, %s39
    %p41 = scmp.eq.s32.totalorder %s15, 0
    %p42 = por %p40, %p41
    %s44 = sadd.s32 %s43, 1
    %p47 = scmp.eq.s32.totalorder %s9, 3
    %p48 = scmp.ne.s32.totalorder %s43, %s45
    %p49 = scmp.eq.s32.totalorder %s9, 0
    %p50 = por %p48, %p49
    %p51 = scmp.ne.s32.totalorder %s43, %s45
    %p52 = scmp.eq.s32.totalorder %s14, 3
    %p53 = por %p51, %p52
    %p54 = scmp.ne.s32.totalorder %s45, %s46
    %p55 = scmp.eq.s32.totalorder %s14, 0
    %p56 = por %p54, %p55
    %p57 = scmp.ne.s32.totalorder %s45, %s46
    %p58 = scmp.eq.s32.totalorder %s15, 3
    %p59 = por %p57, %p58
    %p61 = scmp.ne.s32.totalorder %s46, %s60
    %p62 = scmp.eq.s32.totalorder %s15, 0
    %p63 = por %p61, %p62
    %s65 = sadd.s32 %s64, 1
    %p68 = scmp.eq.s32.totalorder %s9, 3
    %p69 = scmp.ne.s32.totalorder %s64, %s66
    %p70 = scmp.eq.s32.totalorder %s9, 0
    %p71 = por %p69, %p70
    %p72 = scmp.ne.s32.totalorder %s64, %s66
    %p73 = scmp.eq.s32.totalorder %s14, 3
    %p74 = por %p72, %p73
    %p75 = scmp.ne.s32.totalorder %s66, %s67
    %p76 = scmp.eq.s32.totalorder %s14, 0
    %p77 = por %p75, %p76
    %p78 = scmp.ne.s32.totalorder %s66, %s67
    %p79 = scmp.eq.s32.totalorder %s15, 3
    %p80 = por %p78, %p79
    %p82 = scmp.ne.s32.totalorder %s67, %s81
    %p83 = scmp.eq.s32.totalorder %s15, 0
    %p84 = por %p82, %p83
    %s85 = ssub.s32 %s9, %s16
    %p86 = scmp.eq.s32.totalorder %s85, 0
    %s88 = sadd.s32 %s87, 1
    %s89 = scalar_select %p86, %s87, %s88
    %p92 = pneg %p86
    %p93 = scmp.eq.s32.totalorder %s9, 3
    %p94 = por %p92, %p93
    %p95 = scmp.ne.s32.totalorder %s87, %s90
    %p96 = scmp.eq.s32.totalorder %s9, 0
    %p97 = por %p95, %p96
    %p98 = scmp.ne.s32.totalorder %s87, %s90
    %p99 = scmp.eq.s32.totalorder %s14, 3
    %p100 = por %p98, %p99
    %p101 = scmp.ne.s32.totalorder %s90, %s91
    %p102 = scmp.eq.s32.totalorder %s14, 0
    %p103 = por %p101, %p102
    %p104 = scmp.ne.s32.totalorder %s90, %s91
    %p105 = scmp.eq.s32.totalorder %s15, 3
    %p106 = por %p104, %p105
    %p108 = scmp.ne.s32.totalorder %s91, %s107
    %p109 = scmp.eq.s32.totalorder %s15, 0
    %p110 = por %p108, %p109
    %p111 = scmp.le.s32.totalorder 1, %s9
    %p112 = scmp.lt.s32.totalorder %s9, 5
    %p113 = pnand %p111, %p112
    %p114 = pneg %p113
    // Predicated region
    $region9: #{tpu_custom_call.1} parent=5 // pred_check
      _
    $region10: #{tpu_custom_call.1} parent=5 // pred_check_branch
      %116 = sbr.rel (%p113) target = $region12
    $region11: #{tpu_custom_call.1} parent=5 // pred_region
      %s117 = ssub.s32 %s9, 1
      // Predicated region
      $region13: #{tpu_custom_call.1} parent=11 // pred_check
        %p118 = pneg %p56
      $region14: #{tpu_custom_call.1} parent=11 // pred_check_branch
        %120 = sbr.rel (%p118) target = $region16
      $region15: #{tpu_custom_call.1} parent=11 // pred_region
        _
      $region16: #{tpu_custom_call.1} parent=11 // pred_fallthru
        _
      // Predicated region
      $region17: #{tpu_custom_call.1} parent=11 // pred_check
        %p121 = pneg %p77
      $region18: #{tpu_custom_call.1} parent=11 // pred_check_branch
        %123 = sbr.rel (%p121) target = $region20
      $region19: #{tpu_custom_call.1} parent=11 // pred_region
        _
      $region20: #{tpu_custom_call.1} parent=11 // pred_fallthru
        _
    $region12: #{tpu_custom_call.1} parent=5 // pred_fallthru
      _
    %p124 = scmp.lt.s32.totalorder %s9, 4
    // Predicated region
    $region21: #{tpu_custom_call.1} parent=5 // pred_check
      %p125 = pneg %p124
    $region22: #{tpu_custom_call.1} parent=5 // pred_check_branch
      %127 = sbr.rel (%p125) target = $region24
    $region23: #{tpu_custom_call.1} parent=5 // pred_region
      // Predicated region
      $region25: #{tpu_custom_call.1} parent=23 // pred_check
        %p128 = pneg %p29
      $region26: #{tpu_custom_call.1} parent=23 // pred_check_branch
        %130 = sbr.rel (%p128) target = $region28
      $region27: #{tpu_custom_call.1} parent=23 // pred_region
        %s131 = smul.u32 64, %s9
        %p132 = scmp.lt.s32.totalorder %s131, 255
        %s133 = scalar_select %p132, %s131, 255
        %s134 = smul.addr %s133, 2
        %s135 = smul.addr %s134, 4
        %s136 = scalar_lea.vmem %s0, %s135
        %s137 = smul.u32 64, %s9
      $region28: #{tpu_custom_call.1} parent=23 // pred_fallthru
        _
    $region24: #{tpu_custom_call.1} parent=5 // pred_fallthru
      _
    %p138 = scmp.le.s32.totalorder 1, %s9
    %p139 = scmp.lt.s32.totalorder %s9, 5
    %p140 = pnand %p138, %p139
    %p141 = pneg %p140
    // Predicated region
    $region29: #{tpu_custom_call.1} parent=5 // pred_check
      _
    $region30: #{tpu_custom_call.1} parent=5 // pred_check_branch
      %143 = sbr.rel (%p140) target = $region32
    $region31: #{tpu_custom_call.1} parent=5 // pred_region
      %s144 = ssub.s32 %s9, 1
      %s145 = smul.u32 64, %s14
      %p146 = scmp.lt.s32.totalorder %s145, 255
      %s147 = scalar_select %p146, %s145, 255
      %s148 = smul.addr %s147, 2
      %s149 = smul.addr %s148, 4
      %s150 = scalar_lea.vmem %s0, %s149
      %p151 = pneg %p35
      %p152 = pneg %p32
      %p153 = pneg %p56
      %p154 = pneg %p53
      %p155 = pneg %p77
      %p156 = pneg %p74
      %p157 = pneg %p103
      %p158 = pneg %p100
      %s159 = smul.u32 64, %s14
      %p160 = scmp.lt.s32.totalorder %s159, 255
      %s161 = scalar_select %p160, %s159, 255
      %s162 = smul.addr %s161, 4
      %s163 = scalar_lea.vmem %s3, %s162
      %s164 = smul.u32 64, %s14
      %p165 = scmp.lt.s32.totalorder %s164, 255
      %s166 = scalar_select %p165, %s164, 255
      %s167 = smul.addr %s166, 2
      %s168 = smul.addr %s167, 4
      %s169 = scalar_lea.vmem %s0, %s168
      %s170 = smul.u32 64, %s14
      %s171 = smul.u32 64, %s14
      %p172 = scmp.lt.s32.totalorder %s171, 255
      %s173 = scalar_select %p172, %s171, 255
      %s174 = smul.addr %s173, 4
      %s175 = scalar_lea.vmem %s3, %s174
      %s176 = smul.u32 64, %s14
      %v178 = vld [vmem:[%s169] sm:$0xff]
      %v179 = vld [vmem:[%s169 + $0x8] sm:$0xff]
      %v180 = vld [vmem:[%s169 + $0x10] sm:$0xff]
      %v181 = vld [vmem:[%s169 + $0x18] sm:$0xff]
      %v182 = vld [vmem:[%s169 + $0x20] sm:$0xff]
      %v183 = vld [vmem:[%s169 + $0x28] sm:$0xff]
      %v184 = vld [vmem:[%s169 + $0x30] sm:$0xff]
      %v185 = vld [vmem:[%s169 + $0x38] sm:$0xff]
      %v186 = vld [vmem:[%s169 + $0x40] sm:$0xff]
      %v187 = vld [vmem:[%s169 + $0x48] sm:$0xff]
      %v188 = vld [vmem:[%s169 + $0x50] sm:$0xff]
      %v189 = vld [vmem:[%s169 + $0x58] sm:$0xff]
      %v190 = vld [vmem:[%s169 + $0x60] sm:$0xff]
      %v191 = vld [vmem:[%s169 + $0x68] sm:$0xff]
      %v192 = vld [vmem:[%s169 + $0x70] sm:$0xff]
      %v193 = vld [vmem:[%s169 + $0x78] sm:$0xff]
      %v194 = vld [vmem:[%s169 + $0x80] sm:$0xff]
      %v195 = vld [vmem:[%s169 + $0x88] sm:$0xff]
      %v196 = vld [vmem:[%s169 + $0x90] sm:$0xff]
      %v197 = vld [vmem:[%s169 + $0x98] sm:$0xff]
      %v198 = vld [vmem:[%s169 + $0xa0] sm:$0xff]
      %v199 = vld [vmem:[%s169 + $0xa8] sm:$0xff]
      %v200 = vld [vmem:[%s169 + $0xb0] sm:$0xff]
      %v201 = vld [vmem:[%s169 + $0xb8] sm:$0xff]
      %v202 = vld [vmem:[%s169 + $0xc0] sm:$0xff]
      %v203 = vld [vmem:[%s169 + $0xc8] sm:$0xff]
      %v204 = vld [vmem:[%s169 + $0xd0] sm:$0xff]
      %v205 = vld [vmem:[%s169 + $0xd8] sm:$0xff]
      %v206 = vld [vmem:[%s169 + $0xe0] sm:$0xff]
      %v207 = vld [vmem:[%s169 + $0xe8] sm:$0xff]
      %v208 = vld [vmem:[%s169 + $0xf0] sm:$0xff]
      %v209 = vld [vmem:[%s169 + $0xf8] sm:$0xff]
      %v210 = vld [vmem:[%s169 + $0x100] sm:$0xff]
      %v211 = vld [vmem:[%s169 + $0x108] sm:$0xff]
      %v212 = vld [vmem:[%s169 + $0x110] sm:$0xff]
      %v213 = vld [vmem:[%s169 + $0x118] sm:$0xff]
      %v214 = vld [vmem:[%s169 + $0x120] sm:$0xff]
      %v215 = vld [vmem:[%s169 + $0x128] sm:$0xff]
      %v216 = vld [vmem:[%s169 + $0x130] sm:$0xff]
      %v217 = vld [vmem:[%s169 + $0x138] sm:$0xff]
      %v218 = vld [vmem:[%s169 + $0x140] sm:$0xff]
      %v219 = vld [vmem:[%s169 + $0x148] sm:$0xff]
      %v220 = vld [vmem:[%s169 + $0x150] sm:$0xff]
      %v221 = vld [vmem:[%s169 + $0x158] sm:$0xff]
      %v222 = vld [vmem:[%s169 + $0x160] sm:$0xff]
      %v223 = vld [vmem:[%s169 + $0x168] sm:$0xff]
      %v224 = vld [vmem:[%s169 + $0x170] sm:$0xff]
      %v225 = vld [vmem:[%s169 + $0x178] sm:$0xff]
      %v226 = vld [vmem:[%s169 + $0x180] sm:$0xff]
      %v227 = vld [vmem:[%s169 + $0x188] sm:$0xff]
      %v228 = vld [vmem:[%s169 + $0x190] sm:$0xff]
      %v229 = vld [vmem:[%s169 + $0x198] sm:$0xff]
      %v230 = vld [vmem:[%s169 + $0x1a0] sm:$0xff]
      %v231 = vld [vmem:[%s169 + $0x1a8] sm:$0xff]
      %v232 = vld [vmem:[%s169 + $0x1b0] sm:$0xff]
      %v233 = vld [vmem:[%s169 + $0x1b8] sm:$0xff]
      %v234 = vld [vmem:[%s169 + $0x1c0] sm:$0xff]
      %v235 = vld [vmem:[%s169 + $0x1c8] sm:$0xff]
      %v236 = vld [vmem:[%s169 + $0x1d0] sm:$0xff]
      %v237 = vld [vmem:[%s169 + $0x1d8] sm:$0xff]
      %v238 = vld [vmem:[%s169 + $0x1e0] sm:$0xff]
      %v239 = vld [vmem:[%s169 + $0x1e8] sm:$0xff]
      %v240 = vld [vmem:[%s169 + $0x1f0] sm:$0xff]
      %v241 = vld [vmem:[%s169 + $0x1f8] sm:$0xff]
      %v242 = vld [vmem:[%s1] sm:$0xf]
      %v243 = vld [vmem:[%s1 + $0x4] sm:$0xf]
      %v244 = vld [vmem:[%s1 + $0x8] sm:$0xf]
      %v245 = vld [vmem:[%s1 + $0xc] sm:$0xf]
      %v246 = vld [vmem:[%s1 + $0x10] sm:$0xf]
      %v247 = vld [vmem:[%s1 + $0x14] sm:$0xf]
      %v248 = vld [vmem:[%s1 + $0x18] sm:$0xf]
      %v249 = vld [vmem:[%s1 + $0x1c] sm:$0xf]
      %v250 = vld [vmem:[%s1 + $0x20] sm:$0xf]
      %v251 = vld [vmem:[%s1 + $0x24] sm:$0xf]
      %v252 = vld [vmem:[%s1 + $0x28] sm:$0xf]
      %v253 = vld [vmem:[%s1 + $0x2c] sm:$0xf]
      %v254 = vld [vmem:[%s1 + $0x30] sm:$0xf]
      %v255 = vld [vmem:[%s1 + $0x34] sm:$0xf]
      %v256 = vld [vmem:[%s1 + $0x38] sm:$0xf]
      %v257 = vld [vmem:[%s1 + $0x3c] sm:$0xf]
      %v258 = vld [vmem:[%s1 + $0x40] sm:$0xf]
      %v259 = vld [vmem:[%s1 + $0x44] sm:$0xf]
      %v260 = vld [vmem:[%s1 + $0x48] sm:$0x3]
      %v261 = vld [vmem:[%s2] sm:$0x1]
      %v263 = vperm.slane %v261, 0
      %v329 = vunpack.c.l.b16 %v178
      %v330 = vunpack.c.h.b16 %v178
      %v331 = vunpack.c.l.b16 %v179
      %v332 = vunpack.c.h.b16 %v179
      %v333 = vunpack.c.l.b16 %v180
      %v334 = vunpack.c.h.b16 %v180
      %v335 = vunpack.c.l.b16 %v181
      %v336 = vunpack.c.h.b16 %v181
      %v337 = vunpack.c.l.b16 %v182
      %v338 = vunpack.c.h.b16 %v182
      %v339 = vunpack.c.l.b16 %v183
      %v340 = vunpack.c.h.b16 %v183
      %v341 = vunpack.c.l.b16 %v184
      %v342 = vunpack.c.h.b16 %v184
      %v343 = vunpack.c.l.b16 %v185
      %v344 = vunpack.c.h.b16 %v185
      %v345 = vunpack.c.l.b16 %v186
      %v346 = vunpack.c.h.b16 %v186
      %v347 = vunpack.c.l.b16 %v187
      %v348 = vunpack.c.h.b16 %v187
      %v349 = vunpack.c.l.b16 %v188
      %v350 = vunpack.c.h.b16 %v188
      %v351 = vunpack.c.l.b16 %v189
      %v352 = vunpack.c.h.b16 %v189
      %v353 = vunpack.c.l.b16 %v190
      %v354 = vunpack.c.h.b16 %v190
      %v355 = vunpack.c.l.b16 %v191
      %v356 = vunpack.c.h.b16 %v191
      %v357 = vunpack.c.l.b16 %v192
      %v358 = vunpack.c.h.b16 %v192
      %v359 = vunpack.c.l.b16 %v193
      %v360 = vunpack.c.h.b16 %v193
      %v361 = vunpack.c.l.b16 %v194
      %v362 = vunpack.c.h.b16 %v194
      %v363 = vunpack.c.l.b16 %v195
      %v364 = vunpack.c.h.b16 %v195
      %v365 = vunpack.c.l.b16 %v196
      %v366 = vunpack.c.h.b16 %v196
      %v367 = vunpack.c.l.b16 %v197
      %v368 = vunpack.c.h.b16 %v197
      %v369 = vunpack.c.l.b16 %v198
      %v370 = vunpack.c.h.b16 %v198
      %v371 = vunpack.c.l.b16 %v199
      %v372 = vunpack.c.h.b16 %v199
      %v373 = vunpack.c.l.b16 %v200
      %v374 = vunpack.c.h.b16 %v200
      %v375 = vunpack.c.l.b16 %v201
      %v376 = vunpack.c.h.b16 %v201
      %v377 = vunpack.c.l.b16 %v202
      %v378 = vunpack.c.h.b16 %v202
      %v379 = vunpack.c.l.b16 %v203
      %v380 = vunpack.c.h.b16 %v203
      %v381 = vunpack.c.l.b16 %v204
      %v382 = vunpack.c.h.b16 %v204
      %v383 = vunpack.c.l.b16 %v205
      %v384 = vunpack.c.h.b16 %v205
      %v385 = vunpack.c.l.b16 %v206
      %v386 = vunpack.c.h.b16 %v206
      %v387 = vunpack.c.l.b16 %v207
      %v388 = vunpack.c.h.b16 %v207
      %v389 = vunpack.c.l.b16 %v208
      %v390 = vunpack.c.h.b16 %v208
      %v391 = vunpack.c.l.b16 %v209
      %v392 = vunpack.c.h.b16 %v209
      %v393 = vunpack.c.l.b16 %v210
      %v394 = vunpack.c.h.b16 %v210
      %v395 = vunpack.c.l.b16 %v211
      %v396 = vunpack.c.h.b16 %v211
      %v397 = vunpack.c.l.b16 %v212
      %v398 = vunpack.c.h.b16 %v212
      %v399 = vunpack.c.l.b16 %v213
      %v400 = vunpack.c.h.b16 %v213
      %v401 = vunpack.c.l.b16 %v214
      %v402 = vunpack.c.h.b16 %v214
      %v403 = vunpack.c.l.b16 %v215
      %v404 = vunpack.c.h.b16 %v215
      %v405 = vunpack.c.l.b16 %v216
      %v406 = vunpack.c.h.b16 %v216
      %v407 = vunpack.c.l.b16 %v217
      %v408 = vunpack.c.h.b16 %v217
      %v409 = vunpack.c.l.b16 %v218
      %v410 = vunpack.c.h.b16 %v218
      %v411 = vunpack.c.l.b16 %v219
      %v412 = vunpack.c.h.b16 %v219
      %v413 = vunpack.c.l.b16 %v220
      %v414 = vunpack.c.h.b16 %v220
      %v415 = vunpack.c.l.b16 %v221
      %v416 = vunpack.c.h.b16 %v221
      %v417 = vunpack.c.l.b16 %v222
      %v418 = vunpack.c.h.b16 %v222
      %v419 = vunpack.c.l.b16 %v223
      %v420 = vunpack.c.h.b16 %v223
      %v421 = vunpack.c.l.b16 %v224
      %v422 = vunpack.c.h.b16 %v224
      %v423 = vunpack.c.l.b16 %v225
      %v424 = vunpack.c.h.b16 %v225
      %v425 = vunpack.c.l.b16 %v226
      %v426 = vunpack.c.h.b16 %v226
      %v427 = vunpack.c.l.b16 %v227
      %v428 = vunpack.c.h.b16 %v227
      %v429 = vunpack.c.l.b16 %v228
      %v430 = vunpack.c.h.b16 %v228
      %v431 = vunpack.c.l.b16 %v229
      %v432 = vunpack.c.h.b16 %v229
      %v433 = vunpack.c.l.b16 %v230
      %v434 = vunpack.c.h.b16 %v230
      %v435 = vunpack.c.l.b16 %v231
      %v436 = vunpack.c.h.b16 %v231
      %v437 = vunpack.c.l.b16 %v232
      %v438 = vunpack.c.h.b16 %v232
      %v439 = vunpack.c.l.b16 %v233
      %v440 = vunpack.c.h.b16 %v233
      %v441 = vunpack.c.l.b16 %v234
      %v442 = vunpack.c.h.b16 %v234
      %v443 = vunpack.c.l.b16 %v235
      %v444 = vunpack.c.h.b16 %v235
      %v445 = vunpack.c.l.b16 %v236
      %v446 = vunpack.c.h.b16 %v236
      %v447 = vunpack.c.l.b16 %v237
      %v448 = vunpack.c.h.b16 %v237
      %v449 = vunpack.c.l.b16 %v238
      %v450 = vunpack.c.h.b16 %v238
      %v451 = vunpack.c.l.b16 %v239
      %v452 = vunpack.c.h.b16 %v239
      %v453 = vunpack.c.l.b16 %v240
      %v454 = vunpack.c.h.b16 %v240
      %v455 = vunpack.c.l.b16 %v241
      %v456 = vunpack.c.h.b16 %v241
      %v457 = vpack.c.b16 %v331, %v329
      %v458 = vpack.c.b16 %v332, %v330
      %v459 = vpack.c.b16 %v335, %v333
      %v460 = vpack.c.b16 %v336, %v334
      %v461 = vpack.c.b16 %v339, %v337
      %v462 = vpack.c.b16 %v340, %v338
      %v463 = vpack.c.b16 %v343, %v341
      %v464 = vpack.c.b16 %v344, %v342
      %v465 = vpack.c.b16 %v347, %v345
      %v466 = vpack.c.b16 %v348, %v346
      %v467 = vpack.c.b16 %v351, %v349
      %v468 = vpack.c.b16 %v352, %v350
      %v469 = vpack.c.b16 %v355, %v353
      %v470 = vpack.c.b16 %v356, %v354
      %v471 = vpack.c.b16 %v359, %v357
      %v472 = vpack.c.b16 %v360, %v358
      %v473 = vpack.c.b16 %v363, %v361
      %v474 = vpack.c.b16 %v364, %v362
      %v475 = vpack.c.b16 %v367, %v365
      %v476 = vpack.c.b16 %v368, %v366
      %v477 = vpack.c.b16 %v371, %v369
      %v478 = vpack.c.b16 %v372, %v370
      %v479 = vpack.c.b16 %v375, %v373
      %v480 = vpack.c.b16 %v376, %v374
      %v481 = vpack.c.b16 %v379, %v377
      %v482 = vpack.c.b16 %v380, %v378
      %v483 = vpack.c.b16 %v383, %v381
      %v484 = vpack.c.b16 %v384, %v382
      %v485 = vpack.c.b16 %v387, %v385
      %v486 = vpack.c.b16 %v388, %v386
      %v487 = vpack.c.b16 %v391, %v389
      %v488 = vpack.c.b16 %v392, %v390
      %v489 = vpack.c.b16 %v395, %v393
      %v490 = vpack.c.b16 %v396, %v394
      %v491 = vpack.c.b16 %v399, %v397
      %v492 = vpack.c.b16 %v400, %v398
      %v493 = vpack.c.b16 %v403, %v401
      %v494 = vpack.c.b16 %v404, %v402
      %v495 = vpack.c.b16 %v407, %v405
      %v496 = vpack.c.b16 %v408, %v406
      %v497 = vpack.c.b16 %v411, %v409
      %v498 = vpack.c.b16 %v412, %v410
      %v499 = vpack.c.b16 %v415, %v413
      %v500 = vpack.c.b16 %v416, %v414
      %v501 = vpack.c.b16 %v419, %v417
      %v502 = vpack.c.b16 %v420, %v418
      %v503 = vpack.c.b16 %v423, %v421
      %v504 = vpack.c.b16 %v424, %v422
      %v505 = vpack.c.b16 %v427, %v425
      %v506 = vpack.c.b16 %v428, %v426
      %v507 = vpack.c.b16 %v431, %v429
      %v508 = vpack.c.b16 %v432, %v430
      %v509 = vpack.c.b16 %v435, %v433
      %v510 = vpack.c.b16 %v436, %v434
      %v511 = vpack.c.b16 %v439, %v437
      %v512 = vpack.c.b16 %v440, %v438
      %v513 = vpack.c.b16 %v443, %v441
      %v514 = vpack.c.b16 %v444, %v442
      %v515 = vpack.c.b16 %v447, %v445
      %v516 = vpack.c.b16 %v448, %v446
      %v517 = vpack.c.b16 %v451, %v449
      %v518 = vpack.c.b16 %v452, %v450
      %v519 = vpack.c.b16 %v455, %v453
      %v520 = vpack.c.b16 %v456, %v454
      %v572 = vunpack.c.l.b16 %v242
      %v573 = vunpack.c.l.b16 %v243
      %v574 = vunpack.c.l.b16 %v244
      %v575 = vunpack.c.l.b16 %v245
      %v576 = vunpack.c.l.b16 %v246
      %v577 = vunpack.c.l.b16 %v247
      %v578 = vunpack.c.l.b16 %v248
      %v579 = vunpack.c.l.b16 %v249
      %v580 = vunpack.c.l.b16 %v250
      %v581 = vunpack.c.l.b16 %v251
      %v582 = vunpack.c.l.b16 %v252
      %v583 = vunpack.c.l.b16 %v253
      %v584 = vunpack.c.l.b16 %v254
      %v585 = vunpack.c.l.b16 %v255
      %v586 = vunpack.c.l.b16 %v256
      %v587 = vunpack.c.l.b16 %v257
      %v588 = vunpack.c.l.b16 %v258
      %v589 = vunpack.c.l.b16 %v259
      %v590 = vunpack.c.l.b16 %v260
      %v591 = vpack.c.b16 %v573, %v572
      %v592 = vpack.c.b16 %v575, %v574
      %v593 = vpack.c.b16 %v577, %v576
      %v594 = vpack.c.b16 %v579, %v578
      %v595 = vpack.c.b16 %v581, %v580
      %v596 = vpack.c.b16 %v583, %v582
      %v597 = vpack.c.b16 %v585, %v584
      %v598 = vpack.c.b16 %v587, %v586
      %v599 = vpack.c.b16 %v589, %v588
      %v600 = vpack.c.b16 %v590, %v590
      %vm610 = vcmask 154624
      %v612 = vsel %vm610, %v458, 0
      %v615 = vsel %vm610, %v460, 0
      %v618 = vsel %vm610, %v462, 0
      %v621 = vsel %vm610, %v464, 0
      %v624 = vsel %vm610, %v466, 0
      %v627 = vsel %vm610, %v468, 0
      %v630 = vsel %vm610, %v470, 0
      %v633 = vsel %vm610, %v472, 0
      %v636 = vsel %vm610, %v474, 0
      %v639 = vsel %vm610, %v476, 0
      %v642 = vsel %vm610, %v478, 0
      %v645 = vsel %vm610, %v480, 0
      %v648 = vsel %vm610, %v482, 0
      %v651 = vsel %vm610, %v484, 0
      %v654 = vsel %vm610, %v486, 0
      %v657 = vsel %vm610, %v488, 0
      %v660 = vsel %vm610, %v490, 0
      %v663 = vsel %vm610, %v492, 0
      %v666 = vsel %vm610, %v494, 0
      %v669 = vsel %vm610, %v496, 0
      %v672 = vsel %vm610, %v498, 0
      %v675 = vsel %vm610, %v500, 0
      %v678 = vsel %vm610, %v502, 0
      %v681 = vsel %vm610, %v504, 0
      %v684 = vsel %vm610, %v506, 0
      %v687 = vsel %vm610, %v508, 0
      %v690 = vsel %vm610, %v510, 0
      %v693 = vsel %vm610, %v512, 0
      %v696 = vsel %vm610, %v514, 0
      %v699 = vsel %vm610, %v516, 0
      %v702 = vsel %vm610, %v518, 0
      %v705 = vsel %vm610, %v520, 0
      %vm707 = vcmask 1040384
      %vm708 = vcmask 1041408
      %v709 = vsel %vm707, 4294967295, 65535
      %v710 = vsel %vm708, %v709, 0
      %v712 = vand.u32 %v600, %v710
      %714 = vmatpush.bf16.msra.mxu0 %v598
      %715 = vmatpush.bf16.msra.mxu0 %v597
      %716 = vmatpush.bf16.msra.mxu0 %v596
      %717 = vmatpush.bf16.msra.mxu0 %v595
      %718 = vmatpush.bf16.msra.mxu0 %v594
      %719 = vmatpush.bf16.msra.mxu0 %v593
      %720 = vmatpush.bf16.msra.mxu0 %v592
      %721 = vmatpush.bf16.msra.mxu0 %v591
      %722 = vmatmul.bf16.gmra.mxu0 %v457
      %v723 = vpop.f32.mrf.mxu0
      %v724 = vadd.f32 %v263, %v723
      %v725 = vpop.f32.mrf.mxu0
      %v726 = vadd.f32 %v263, %v725
      %727 = vmatmul.bf16.gmra.mxu0 %v459
      %v728 = vpop.f32.mrf.mxu0
      %v729 = vadd.f32 %v263, %v728
      %v730 = vpop.f32.mrf.mxu0
      %v731 = vadd.f32 %v263, %v730
      %732 = vmatmul.bf16.gmra.mxu0 %v461
      %v733 = vpop.f32.mrf.mxu0
      %v734 = vadd.f32 %v263, %v733
      %v735 = vpop.f32.mrf.mxu0
      %v736 = vadd.f32 %v263, %v735
      %737 = vmatmul.bf16.gmra.mxu0 %v463
      %v738 = vpop.f32.mrf.mxu0
      %v739 = vadd.f32 %v263, %v738
      %v740 = vpop.f32.mrf.mxu0
      %v741 = vadd.f32 %v263, %v740
      %742 = vmatmul.bf16.gmra.mxu0 %v465
      %v743 = vpop.f32.mrf.mxu0
      %v744 = vadd.f32 %v263, %v743
      %v745 = vpop.f32.mrf.mxu0
      %v746 = vadd.f32 %v263, %v745
      %747 = vmatmul.bf16.gmra.mxu0 %v467
      %v748 = vpop.f32.mrf.mxu0
      %v749 = vadd.f32 %v263, %v748
      %v750 = vpop.f32.mrf.mxu0
      %v751 = vadd.f32 %v263, %v750
      %752 = vmatmul.bf16.gmra.mxu0 %v469
      %v753 = vpop.f32.mrf.mxu0
      %v754 = vadd.f32 %v263, %v753
      %v755 = vpop.f32.mrf.mxu0
      %v756 = vadd.f32 %v263, %v755
      %757 = vmatmul.bf16.gmra.mxu0 %v471
      %v758 = vpop.f32.mrf.mxu0
      %v759 = vadd.f32 %v263, %v758
      %v760 = vpop.f32.mrf.mxu0
      %v761 = vadd.f32 %v263, %v760
      %762 = vmatmul.bf16.gmra.mxu0 %v473
      %v763 = vpop.f32.mrf.mxu0
      %v764 = vadd.f32 %v263, %v763
      %v765 = vpop.f32.mrf.mxu0
      %v766 = vadd.f32 %v263, %v765
      %767 = vmatmul.bf16.gmra.mxu0 %v475
      %v768 = vpop.f32.mrf.mxu0
      %v769 = vadd.f32 %v263, %v768
      %v770 = vpop.f32.mrf.mxu0
      %v771 = vadd.f32 %v263, %v770
      %772 = vmatmul.bf16.gmra.mxu0 %v477
      %v773 = vpop.f32.mrf.mxu0
      %v774 = vadd.f32 %v263, %v773
      %v775 = vpop.f32.mrf.mxu0
      %v776 = vadd.f32 %v263, %v775
      %777 = vmatmul.bf16.gmra.mxu0 %v479
      %v778 = vpop.f32.mrf.mxu0
      %v779 = vadd.f32 %v263, %v778
      %v780 = vpop.f32.mrf.mxu0
      %v781 = vadd.f32 %v263, %v780
      %782 = vmatmul.bf16.gmra.mxu0 %v481
      %v783 = vpop.f32.mrf.mxu0
      %v784 = vadd.f32 %v263, %v783
      %v785 = vpop.f32.mrf.mxu0
      %v786 = vadd.f32 %v263, %v785
      %787 = vmatmul.bf16.gmra.mxu0 %v483
      %v788 = vpop.f32.mrf.mxu0
      %v789 = vadd.f32 %v263, %v788
      %v790 = vpop.f32.mrf.mxu0
      %v791 = vadd.f32 %v263, %v790
      %792 = vmatmul.bf16.gmra.mxu0 %v485
      %v793 = vpop.f32.mrf.mxu0
      %v794 = vadd.f32 %v263, %v793
      %v795 = vpop.f32.mrf.mxu0
      %v796 = vadd.f32 %v263, %v795
      %797 = vmatmul.bf16.gmra.mxu0 %v487
      %v798 = vpop.f32.mrf.mxu0
      %v799 = vadd.f32 %v263, %v798
      %v800 = vpop.f32.mrf.mxu0
      %v801 = vadd.f32 %v263, %v800
      %802 = vmatmul.bf16.gmra.mxu0 %v489
      %v803 = vpop.f32.mrf.mxu0
      %v804 = vadd.f32 %v263, %v803
      %v805 = vpop.f32.mrf.mxu0
      %v806 = vadd.f32 %v263, %v805
      %807 = vmatmul.bf16.gmra.mxu0 %v491
      %v808 = vpop.f32.mrf.mxu0
      %v809 = vadd.f32 %v263, %v808
      %v810 = vpop.f32.mrf.mxu0
      %v811 = vadd.f32 %v263, %v810
      %812 = vmatmul.bf16.gmra.mxu0 %v493
      %v813 = vpop.f32.mrf.mxu0
      %v814 = vadd.f32 %v263, %v813
      %v815 = vpop.f32.mrf.mxu0
      %v816 = vadd.f32 %v263, %v815
      %817 = vmatmul.bf16.gmra.mxu0 %v495
      %v818 = vpop.f32.mrf.mxu0
      %v819 = vadd.f32 %v263, %v818
      %v820 = vpop.f32.mrf.mxu0
      %v821 = vadd.f32 %v263, %v820
      %822 = vmatmul.bf16.gmra.mxu0 %v497
      %v823 = vpop.f32.mrf.mxu0
      %v824 = vadd.f32 %v263, %v823
      %v825 = vpop.f32.mrf.mxu0
      %v826 = vadd.f32 %v263, %v825
      %827 = vmatmul.bf16.gmra.mxu0 %v499
      %v828 = vpop.f32.mrf.mxu0
      %v829 = vadd.f32 %v263, %v828
      %v830 = vpop.f32.mrf.mxu0
      %v831 = vadd.f32 %v263, %v830
      %832 = vmatmul.bf16.gmra.mxu0 %v501
      %v833 = vpop.f32.mrf.mxu0
      %v834 = vadd.f32 %v263, %v833
      %v835 = vpop.f32.mrf.mxu0
      %v836 = vadd.f32 %v263, %v835
      %837 = vmatmul.bf16.gmra.mxu0 %v503
      %v838 = vpop.f32.mrf.mxu0
      %v839 = vadd.f32 %v263, %v838
      %v840 = vpop.f32.mrf.mxu0
      %v841 = vadd.f32 %v263, %v840
      %842 = vmatmul.bf16.gmra.mxu0 %v505
      %v843 = vpop.f32.mrf.mxu0
      %v844 = vadd.f32 %v263, %v843
      %v845 = vpop.f32.mrf.mxu0
      %v846 = vadd.f32 %v263, %v845
      %847 = vmatmul.bf16.gmra.mxu0 %v507
      %v848 = vpop.f32.mrf.mxu0
      %v849 = vadd.f32 %v263, %v848
      %v850 = vpop.f32.mrf.mxu0
      %v851 = vadd.f32 %v263, %v850
      %852 = vmatmul.bf16.gmra.mxu0 %v509
      %v853 = vpop.f32.mrf.mxu0
      %v854 = vadd.f32 %v263, %v853
      %v855 = vpop.f32.mrf.mxu0
      %v856 = vadd.f32 %v263, %v855
      %857 = vmatmul.bf16.gmra.mxu0 %v511
      %v858 = vpop.f32.mrf.mxu0
      %v859 = vadd.f32 %v263, %v858
      %v860 = vpop.f32.mrf.mxu0
      %v861 = vadd.f32 %v263, %v860
      %862 = vmatmul.bf16.gmra.mxu0 %v513
      %v863 = vpop.f32.mrf.mxu0
      %v864 = vadd.f32 %v263, %v863
      %v865 = vpop.f32.mrf.mxu0
      %v866 = vadd.f32 %v263, %v865
      %867 = vmatmul.bf16.gmra.mxu0 %v515
      %v868 = vpop.f32.mrf.mxu0
      %v869 = vadd.f32 %v263, %v868
      %v870 = vpop.f32.mrf.mxu0
      %v871 = vadd.f32 %v263, %v870
      %872 = vmatmul.bf16.gmra.mxu0 %v517
      %v873 = vpop.f32.mrf.mxu0
      %v874 = vadd.f32 %v263, %v873
      %v875 = vpop.f32.mrf.mxu0
      %v876 = vadd.f32 %v263, %v875
      %877 = vmatmul.bf16.gmra.mxu0 %v519
      %v878 = vpop.f32.mrf.mxu0
      %v879 = vadd.f32 %v263, %v878
      %v880 = vpop.f32.mrf.mxu0
      %v881 = vadd.f32 %v263, %v880
      %882 = vdwg.mxu0
      %883 = vmatpush.bf16.msra.mxu0 0
      %884 = vmatpush.bf16.msra.mxu0 0
      %885 = vmatpush.bf16.msra.mxu0 0
      %886 = vmatpush.bf16.msra.mxu0 0
      %887 = vmatpush.bf16.msra.mxu0 0
      %888 = vmatpush.bf16.msra.mxu0 0
      %889 = vmatpush.bf16.msra.mxu0 %v712
      %890 = vmatpush.bf16.msra.mxu0 %v599
      %891 = vmatmul.bf16.gmra.mxu0 %v612
      %v892 = vpop.f32.mrf.mxu0
      %v893 = vadd.f32 %v724, %v892
      %v894 = vpop.f32.mrf.mxu0
      %v895 = vadd.f32 %v726, %v894
      %896 = vmatmul.bf16.gmra.mxu0 %v615
      %v897 = vpop.f32.mrf.mxu0
      %v898 = vadd.f32 %v729, %v897
      %v899 = vpop.f32.mrf.mxu0
      %v900 = vadd.f32 %v731, %v899
      %901 = vmatmul.bf16.gmra.mxu0 %v618
      %v902 = vpop.f32.mrf.mxu0
      %v903 = vadd.f32 %v734, %v902
      %v904 = vpop.f32.mrf.mxu0
      %v905 = vadd.f32 %v736, %v904
      %906 = vmatmul.bf16.gmra.mxu0 %v621
      %v907 = vpop.f32.mrf.mxu0
      %v908 = vadd.f32 %v739, %v907
      %v909 = vpop.f32.mrf.mxu0
      %v910 = vadd.f32 %v741, %v909
      %911 = vmatmul.bf16.gmra.mxu0 %v624
      %v912 = vpop.f32.mrf.mxu0
      %v913 = vadd.f32 %v744, %v912
      %v914 = vpop.f32.mrf.mxu0
      %v915 = vadd.f32 %v746, %v914
      %916 = vmatmul.bf16.gmra.mxu0 %v627
      %v917 = vpop.f32.mrf.mxu0
      %v918 = vadd.f32 %v749, %v917
      %v919 = vpop.f32.mrf.mxu0
      %v920 = vadd.f32 %v751, %v919
      %921 = vmatmul.bf16.gmra.mxu0 %v630
      %v922 = vpop.f32.mrf.mxu0
      %v923 = vadd.f32 %v754, %v922
      %v924 = vpop.f32.mrf.mxu0
      %v925 = vadd.f32 %v756, %v924
      %926 = vmatmul.bf16.gmra.mxu0 %v633
      %v927 = vpop.f32.mrf.mxu0
      %v928 = vadd.f32 %v759, %v927
      %v929 = vpop.f32.mrf.mxu0
      %v930 = vadd.f32 %v761, %v929
      %931 = vmatmul.bf16.gmra.mxu0 %v636
      %v932 = vpop.f32.mrf.mxu0
      %v933 = vadd.f32 %v764, %v932
      %v934 = vpop.f32.mrf.mxu0
      %v935 = vadd.f32 %v766, %v934
      %936 = vmatmul.bf16.gmra.mxu0 %v639
      %v937 = vpop.f32.mrf.mxu0
      %v938 = vadd.f32 %v769, %v937
      %v939 = vpop.f32.mrf.mxu0
      %v940 = vadd.f32 %v771, %v939
      %941 = vmatmul.bf16.gmra.mxu0 %v642
      %v942 = vpop.f32.mrf.mxu0
      %v943 = vadd.f32 %v774, %v942
      %v944 = vpop.f32.mrf.mxu0
      %v945 = vadd.f32 %v776, %v944
      %946 = vmatmul.bf16.gmra.mxu0 %v645
      %v947 = vpop.f32.mrf.mxu0
      %v948 = vadd.f32 %v779, %v947
      %v949 = vpop.f32.mrf.mxu0
      %v950 = vadd.f32 %v781, %v949
      %951 = vmatmul.bf16.gmra.mxu0 %v648
      %v952 = vpop.f32.mrf.mxu0
      %v953 = vadd.f32 %v784, %v952
      %v954 = vpop.f32.mrf.mxu0
      %v955 = vadd.f32 %v786, %v954
      %956 = vmatmul.bf16.gmra.mxu0 %v651
      %v957 = vpop.f32.mrf.mxu0
      %v958 = vadd.f32 %v789, %v957
      %v959 = vpop.f32.mrf.mxu0
      %v960 = vadd.f32 %v791, %v959
      %961 = vmatmul.bf16.gmra.mxu0 %v654
      %v962 = vpop.f32.mrf.mxu0
      %v963 = vadd.f32 %v794, %v962
      %v964 = vpop.f32.mrf.mxu0
      %v965 = vadd.f32 %v796, %v964
      %966 = vmatmul.bf16.gmra.mxu0 %v657
      %v967 = vpop.f32.mrf.mxu0
      %v968 = vadd.f32 %v799, %v967
      %v969 = vpop.f32.mrf.mxu0
      %v970 = vadd.f32 %v801, %v969
      %971 = vmatmul.bf16.gmra.mxu0 %v660
      %v972 = vpop.f32.mrf.mxu0
      %v973 = vadd.f32 %v804, %v972
      %v974 = vpop.f32.mrf.mxu0
      %v975 = vadd.f32 %v806, %v974
      %976 = vmatmul.bf16.gmra.mxu0 %v663
      %v977 = vpop.f32.mrf.mxu0
      %v978 = vadd.f32 %v809, %v977
      %v979 = vpop.f32.mrf.mxu0
      %v980 = vadd.f32 %v811, %v979
      %981 = vmatmul.bf16.gmra.mxu0 %v666
      %v982 = vpop.f32.mrf.mxu0
      %v983 = vadd.f32 %v814, %v982
      %v984 = vpop.f32.mrf.mxu0
      %v985 = vadd.f32 %v816, %v984
      %986 = vmatmul.bf16.gmra.mxu0 %v669
      %v987 = vpop.f32.mrf.mxu0
      %v988 = vadd.f32 %v819, %v987
      %v989 = vpop.f32.mrf.mxu0
      %v990 = vadd.f32 %v821, %v989
      %991 = vmatmul.bf16.gmra.mxu0 %v672
      %v992 = vpop.f32.mrf.mxu0
      %v993 = vadd.f32 %v824, %v992
      %v994 = vpop.f32.mrf.mxu0
      %v995 = vadd.f32 %v826, %v994
      %996 = vmatmul.bf16.gmra.mxu0 %v675
      %v997 = vpop.f32.mrf.mxu0
      %v998 = vadd.f32 %v829, %v997
      %v999 = vpop.f32.mrf.mxu0
      %v1000 = vadd.f32 %v831, %v999
      %1001 = vmatmul.bf16.gmra.mxu0 %v678
      %v1002 = vpop.f32.mrf.mxu0
      %v1003 = vadd.f32 %v834, %v1002
      %v1004 = vpop.f32.mrf.mxu0
      %v1005 = vadd.f32 %v836, %v1004
      %1006 = vmatmul.bf16.gmra.mxu0 %v681
      %v1007 = vpop.f32.mrf.mxu0
      %v1008 = vadd.f32 %v839, %v1007
      %v1009 = vpop.f32.mrf.mxu0
      %v1010 = vadd.f32 %v841, %v1009
      %1011 = vmatmul.bf16.gmra.mxu0 %v684
      %v1012 = vpop.f32.mrf.mxu0
      %v1013 = vadd.f32 %v844, %v1012
      %v1014 = vpop.f32.mrf.mxu0
      %v1015 = vadd.f32 %v846, %v1014
      %1016 = vmatmul.bf16.gmra.mxu0 %v687
      %v1017 = vpop.f32.mrf.mxu0
      %v1018 = vadd.f32 %v849, %v1017
      %v1019 = vpop.f32.mrf.mxu0
      %v1020 = vadd.f32 %v851, %v1019
      %1021 = vmatmul.bf16.gmra.mxu0 %v690
      %v1022 = vpop.f32.mrf.mxu0
      %v1023 = vadd.f32 %v854, %v1022
      %v1024 = vpop.f32.mrf.mxu0
      %v1025 = vadd.f32 %v856, %v1024
      %1026 = vmatmul.bf16.gmra.mxu0 %v693
      %v1027 = vpop.f32.mrf.mxu0
      %v1028 = vadd.f32 %v859, %v1027
      %v1029 = vpop.f32.mrf.mxu0
      %v1030 = vadd.f32 %v861, %v1029
      %1031 = vmatmul.bf16.gmra.mxu0 %v696
      %v1032 = vpop.f32.mrf.mxu0
      %v1033 = vadd.f32 %v864, %v1032
      %v1034 = vpop.f32.mrf.mxu0
      %v1035 = vadd.f32 %v866, %v1034
      %1036 = vmatmul.bf16.gmra.mxu0 %v699
      %v1037 = vpop.f32.mrf.mxu0
      %v1038 = vadd.f32 %v869, %v1037
      %v1039 = vpop.f32.mrf.mxu0
      %v1040 = vadd.f32 %v871, %v1039
      %1041 = vmatmul.bf16.gmra.mxu0 %v702
      %v1042 = vpop.f32.mrf.mxu0
      %v1043 = vadd.f32 %v874, %v1042
      %v1044 = vpop.f32.mrf.mxu0
      %v1045 = vadd.f32 %v876, %v1044
      %1046 = vmatmul.bf16.gmra.mxu0 %v705
      %v1047 = vpop.f32.mrf.mxu0
      %v1048 = vadd.f32 %v879, %v1047
      %v1049 = vpop.f32.mrf.mxu0
      %v1050 = vadd.f32 %v881, %v1049
      %1051 = vdwg.mxu0
      %v1052 = vmax.f32 %v893, 0.0
      %v1053 = vmax.f32 %v895, 0.0
      %v1054 = vmax.f32 %v898, 0.0
      %v1055 = vmax.f32 %v900, 0.0
      %v1056 = vmax.f32 %v903, 0.0
      %v1057 = vmax.f32 %v905, 0.0
      %v1058 = vmax.f32 %v908, 0.0
      %v1059 = vmax.f32 %v910, 0.0
      %v1060 = vmax.f32 %v913, 0.0
      %v1061 = vmax.f32 %v915, 0.0
      %v1062 = vmax.f32 %v918, 0.0
      %v1063 = vmax.f32 %v920, 0.0
      %v1064 = vmax.f32 %v923, 0.0
      %v1065 = vmax.f32 %v925, 0.0
      %v1066 = vmax.f32 %v928, 0.0
      %v1067 = vmax.f32 %v930, 0.0
      %v1068 = vmax.f32 %v933, 0.0
      %v1069 = vmax.f32 %v935, 0.0
      %v1070 = vmax.f32 %v938, 0.0
      %v1071 = vmax.f32 %v940, 0.0
      %v1072 = vmax.f32 %v943, 0.0
      %v1073 = vmax.f32 %v945, 0.0
      %v1074 = vmax.f32 %v948, 0.0
      %v1075 = vmax.f32 %v950, 0.0
      %v1076 = vmax.f32 %v953, 0.0
      %v1077 = vmax.f32 %v955, 0.0
      %v1078 = vmax.f32 %v958, 0.0
      %v1079 = vmax.f32 %v960, 0.0
      %v1080 = vmax.f32 %v963, 0.0
      %v1081 = vmax.f32 %v965, 0.0
      %v1082 = vmax.f32 %v968, 0.0
      %v1083 = vmax.f32 %v970, 0.0
      %v1084 = vmax.f32 %v973, 0.0
      %v1085 = vmax.f32 %v975, 0.0
      %v1086 = vmax.f32 %v978, 0.0
      %v1087 = vmax.f32 %v980, 0.0
      %v1088 = vmax.f32 %v983, 0.0
      %v1089 = vmax.f32 %v985, 0.0
      %v1090 = vmax.f32 %v988, 0.0
      %v1091 = vmax.f32 %v990, 0.0
      %v1092 = vmax.f32 %v993, 0.0
      %v1093 = vmax.f32 %v995, 0.0
      %v1094 = vmax.f32 %v998, 0.0
      %v1095 = vmax.f32 %v1000, 0.0
      %v1096 = vmax.f32 %v1003, 0.0
      %v1097 = vmax.f32 %v1005, 0.0
      %v1098 = vmax.f32 %v1008, 0.0
      %v1099 = vmax.f32 %v1010, 0.0
      %v1100 = vmax.f32 %v1013, 0.0
      %v1101 = vmax.f32 %v1015, 0.0
      %v1102 = vmax.f32 %v1018, 0.0
      %v1103 = vmax.f32 %v1020, 0.0
      %v1104 = vmax.f32 %v1023, 0.0
      %v1105 = vmax.f32 %v1025, 0.0
      %v1106 = vmax.f32 %v1028, 0.0
      %v1107 = vmax.f32 %v1030, 0.0
      %v1108 = vmax.f32 %v1033, 0.0
      %v1109 = vmax.f32 %v1035, 0.0
      %v1110 = vmax.f32 %v1038, 0.0
      %v1111 = vmax.f32 %v1040, 0.0
      %v1112 = vmax.f32 %v1043, 0.0
      %v1113 = vmax.f32 %v1045, 0.0
      %v1114 = vmax.f32 %v1048, 0.0
      %v1115 = vmax.f32 %v1050, 0.0
      %v1116 = vpack.c.bf16 %v1052, %v1052
      %v1117 = vpack.c.bf16 %v1053, %v1053
      %v1118 = vpack.c.bf16 %v1054, %v1054
      %v1119 = vpack.c.bf16 %v1055, %v1055
      %v1120 = vpack.c.bf16 %v1056, %v1056
      %v1121 = vpack.c.bf16 %v1057, %v1057
      %v1122 = vpack.c.bf16 %v1058, %v1058
      %v1123 = vpack.c.bf16 %v1059, %v1059
      %v1124 = vpack.c.bf16 %v1060, %v1060
      %v1125 = vpack.c.bf16 %v1061, %v1061
      %v1126 = vpack.c.bf16 %v1062, %v1062
      %v1127 = vpack.c.bf16 %v1063, %v1063
      %v1128 = vpack.c.bf16 %v1064, %v1064
      %v1129 = vpack.c.bf16 %v1065, %v1065
      %v1130 = vpack.c.bf16 %v1066, %v1066
      %v1131 = vpack.c.bf16 %v1067, %v1067
      %v1132 = vpack.c.bf16 %v1068, %v1068
      %v1133 = vpack.c.bf16 %v1069, %v1069
      %v1134 = vpack.c.bf16 %v1070, %v1070
      %v1135 = vpack.c.bf16 %v1071, %v1071
      %v1136 = vpack.c.bf16 %v1072, %v1072
      %v1137 = vpack.c.bf16 %v1073, %v1073
      %v1138 = vpack.c.bf16 %v1074, %v1074
      %v1139 = vpack.c.bf16 %v1075, %v1075
      %v1140 = vpack.c.bf16 %v1076, %v1076
      %v1141 = vpack.c.bf16 %v1077, %v1077
      %v1142 = vpack.c.bf16 %v1078, %v1078
      %v1143 = vpack.c.bf16 %v1079, %v1079
      %v1144 = vpack.c.bf16 %v1080, %v1080
      %v1145 = vpack.c.bf16 %v1081, %v1081
      %v1146 = vpack.c.bf16 %v1082, %v1082
      %v1147 = vpack.c.bf16 %v1083, %v1083
      %v1148 = vpack.c.bf16 %v1084, %v1084
      %v1149 = vpack.c.bf16 %v1085, %v1085
      %v1150 = vpack.c.bf16 %v1086, %v1086
      %v1151 = vpack.c.bf16 %v1087, %v1087
      %v1152 = vpack.c.bf16 %v1088, %v1088
      %v1153 = vpack.c.bf16 %v1089, %v1089
      %v1154 = vpack.c.bf16 %v1090, %v1090
      %v1155 = vpack.c.bf16 %v1091, %v1091
      %v1156 = vpack.c.bf16 %v1092, %v1092
      %v1157 = vpack.c.bf16 %v1093, %v1093
      %v1158 = vpack.c.bf16 %v1094, %v1094
      %v1159 = vpack.c.bf16 %v1095, %v1095
      %v1160 = vpack.c.bf16 %v1096, %v1096
      %v1161 = vpack.c.bf16 %v1097, %v1097
      %v1162 = vpack.c.bf16 %v1098, %v1098
      %v1163 = vpack.c.bf16 %v1099, %v1099
      %v1164 = vpack.c.bf16 %v1100, %v1100
      %v1165 = vpack.c.bf16 %v1101, %v1101
      %v1166 = vpack.c.bf16 %v1102, %v1102
      %v1167 = vpack.c.bf16 %v1103, %v1103
      %v1168 = vpack.c.bf16 %v1104, %v1104
      %v1169 = vpack.c.bf16 %v1105, %v1105
      %v1170 = vpack.c.bf16 %v1106, %v1106
      %v1171 = vpack.c.bf16 %v1107, %v1107
      %v1172 = vpack.c.bf16 %v1108, %v1108
      %v1173 = vpack.c.bf16 %v1109, %v1109
      %v1174 = vpack.c.bf16 %v1110, %v1110
      %v1175 = vpack.c.bf16 %v1111, %v1111
      %v1176 = vpack.c.bf16 %v1112, %v1112
      %v1177 = vpack.c.bf16 %v1113, %v1113
      %v1178 = vpack.c.bf16 %v1114, %v1114
      %v1179 = vpack.c.bf16 %v1115, %v1115
      %vm1180 = vcmask 519168
      %1181 = vst.msk [vmem:[%s175] sm:$0xf] %vm1180, %v1116
      %1182 = vst.msk [vmem:[%s175 + $0x4] sm:$0xf] %vm1180, %v1117
      %1183 = vst.msk [vmem:[%s175 + $0x8] sm:$0xf] %vm1180, %v1118
      %1184 = vst.msk [vmem:[%s175 + $0xc] sm:$0xf] %vm1180, %v1119
      %1185 = vst.msk [vmem:[%s175 + $0x10] sm:$0xf] %vm1180, %v1120
      %1186 = vst.msk [vmem:[%s175 + $0x14] sm:$0xf] %vm1180, %v1121
      %1187 = vst.msk [vmem:[%s175 + $0x18] sm:$0xf] %vm1180, %v1122
      %1188 = vst.msk [vmem:[%s175 + $0x1c] sm:$0xf] %vm1180, %v1123
      %1189 = vst.msk [vmem:[%s175 + $0x20] sm:$0xf] %vm1180, %v1124
      %1190 = vst.msk [vmem:[%s175 + $0x24] sm:$0xf] %vm1180, %v1125
      %1191 = vst.msk [vmem:[%s175 + $0x28] sm:$0xf] %vm1180, %v1126
      %1192 = vst.msk [vmem:[%s175 + $0x2c] sm:$0xf] %vm1180, %v1127
      %1193 = vst.msk [vmem:[%s175 + $0x30] sm:$0xf] %vm1180, %v1128
      %1194 = vst.msk [vmem:[%s175 + $0x34] sm:$0xf] %vm1180, %v1129
      %1195 = vst.msk [vmem:[%s175 + $0x38] sm:$0xf] %vm1180, %v1130
      %1196 = vst.msk [vmem:[%s175 + $0x3c] sm:$0xf] %vm1180, %v1131
      %1197 = vst.msk [vmem:[%s175 + $0x40] sm:$0xf] %vm1180, %v1132
      %1198 = vst.msk [vmem:[%s175 + $0x44] sm:$0xf] %vm1180, %v1133
      %1199 = vst.msk [vmem:[%s175 + $0x48] sm:$0xf] %vm1180, %v1134
      %1200 = vst.msk [vmem:[%s175 + $0x4c] sm:$0xf] %vm1180, %v1135
      %1201 = vst.msk [vmem:[%s175 + $0x50] sm:$0xf] %vm1180, %v1136
      %1202 = vst.msk [vmem:[%s175 + $0x54] sm:$0xf] %vm1180, %v1137
      %1203 = vst.msk [vmem:[%s175 + $0x58] sm:$0xf] %vm1180, %v1138
      %1204 = vst.msk [vmem:[%s175 + $0x5c] sm:$0xf] %vm1180, %v1139
      %1205 = vst.msk [vmem:[%s175 + $0x60] sm:$0xf] %vm1180, %v1140
      %1206 = vst.msk [vmem:[%s175 + $0x64] sm:$0xf] %vm1180, %v1141
      %1207 = vst.msk [vmem:[%s175 + $0x68] sm:$0xf] %vm1180, %v1142
      %1208 = vst.msk [vmem:[%s175 + $0x6c] sm:$0xf] %vm1180, %v1143
      %1209 = vst.msk [vmem:[%s175 + $0x70] sm:$0xf] %vm1180, %v1144
      %1210 = vst.msk [vmem:[%s175 + $0x74] sm:$0xf] %vm1180, %v1145
      %1211 = vst.msk [vmem:[%s175 + $0x78] sm:$0xf] %vm1180, %v1146
      %1212 = vst.msk [vmem:[%s175 + $0x7c] sm:$0xf] %vm1180, %v1147
      %1213 = vst.msk [vmem:[%s175 + $0x80] sm:$0xf] %vm1180, %v1148
      %1214 = vst.msk [vmem:[%s175 + $0x84] sm:$0xf] %vm1180, %v1149
      %1215 = vst.msk [vmem:[%s175 + $0x88] sm:$0xf] %vm1180, %v1150
      %1216 = vst.msk [vmem:[%s175 + $0x8c] sm:$0xf] %vm1180, %v1151
      %1217 = vst.msk [vmem:[%s175 + $0x90] sm:$0xf] %vm1180, %v1152
      %1218 = vst.msk [vmem:[%s175 + $0x94] sm:$0xf] %vm1180, %v1153
      %1219 = vst.msk [vmem:[%s175 + $0x98] sm:$0xf] %vm1180, %v1154
      %1220 = vst.msk [vmem:[%s175 + $0x9c] sm:$0xf] %vm1180, %v1155
      %1221 = vst.msk [vmem:[%s175 + $0xa0] sm:$0xf] %vm1180, %v1156
      %1222 = vst.msk [vmem:[%s175 + $0xa4] sm:$0xf] %vm1180, %v1157
      %1223 = vst.msk [vmem:[%s175 + $0xa8] sm:$0xf] %vm1180, %v1158
      %1224 = vst.msk [vmem:[%s175 + $0xac] sm:$0xf] %vm1180, %v1159
      %1225 = vst.msk [vmem:[%s175 + $0xb0] sm:$0xf] %vm1180, %v1160
      %1226 = vst.msk [vmem:[%s175 + $0xb4] sm:$0xf] %vm1180, %v1161
      %1227 = vst.msk [vmem:[%s175 + $0xb8] sm:$0xf] %vm1180, %v1162
      %1228 = vst.msk [vmem:[%s175 + $0xbc] sm:$0xf] %vm1180, %v1163
      %1229 = vst.msk [vmem:[%s175 + $0xc0] sm:$0xf] %vm1180, %v1164
      %1230 = vst.msk [vmem:[%s175 + $0xc4] sm:$0xf] %vm1180, %v1165
      %1231 = vst.msk [vmem:[%s175 + $0xc8] sm:$0xf] %vm1180, %v1166
      %1232 = vst.msk [vmem:[%s175 + $0xcc] sm:$0xf] %vm1180, %v1167
      %1233 = vst.msk [vmem:[%s175 + $0xd0] sm:$0xf] %vm1180, %v1168
      %1234 = vst.msk [vmem:[%s175 + $0xd4] sm:$0xf] %vm1180, %v1169
      %1235 = vst.msk [vmem:[%s175 + $0xd8] sm:$0xf] %vm1180, %v1170
      %1236 = vst.msk [vmem:[%s175 + $0xdc] sm:$0xf] %vm1180, %v1171
      %1237 = vst.msk [vmem:[%s175 + $0xe0] sm:$0xf] %vm1180, %v1172
      %1238 = vst.msk [vmem:[%s175 + $0xe4] sm:$0xf] %vm1180, %v1173
      %1239 = vst.msk [vmem:[%s175 + $0xe8] sm:$0xf] %vm1180, %v1174
      %1240 = vst.msk [vmem:[%s175 + $0xec] sm:$0xf] %vm1180, %v1175
      %1241 = vst.msk [vmem:[%s175 + $0xf0] sm:$0xf] %vm1180, %v1176
      %1242 = vst.msk [vmem:[%s175 + $0xf4] sm:$0xf] %vm1180, %v1177
      %1243 = vst.msk [vmem:[%s175 + $0xf8] sm:$0xf] %vm1180, %v1178
      %1244 = vst.msk [vmem:[%s175 + $0xfc] sm:$0xf] %vm1180, %v1179
      %s1245 = smul.u32 64, %s14
      %p1246 = scmp.lt.s32.totalorder %s1245, 255
      %s1247 = scalar_select %p1246, %s1245, 255
      %s1248 = smul.addr %s1247, 4
      %s1249 = scalar_lea.vmem %s3, %s1248
      // Predicated region
      $region33: #{tpu_custom_call.1} parent=31 // pred_check
        %p1250 = pneg %p100
      $region34: #{tpu_custom_call.1} parent=31 // pred_check_branch
        %1252 = sbr.rel (%p1250) target = $region36
      $region35: #{tpu_custom_call.1} parent=31 // pred_region
        %s1253 = smul.u32 64, %s14
      $region36: #{tpu_custom_call.1} parent=31 // pred_fallthru
        _
    $region32: #{tpu_custom_call.1} parent=5 // pred_fallthru
      _
    %p1254 = scmp.le.s32.totalorder 2, %s9
    // Predicated region
    $region37: #{tpu_custom_call.1} parent=5 // pred_check
      %p1255 = pneg %p1254
    $region38: #{tpu_custom_call.1} parent=5 // pred_check_branch
      %1257 = sbr.rel (%p1255) target = $region40
    $region39: #{tpu_custom_call.1} parent=5 // pred_region
      %s1258 = ssub.s32 %s9, 2
      // Predicated region
      $region41: #{tpu_custom_call.1} parent=39 // pred_check
        %p1259 = pneg %p106
      $region42: #{tpu_custom_call.1} parent=39 // pred_check_branch
        %1261 = sbr.rel (%p1259) target = $region44
      $region43: #{tpu_custom_call.1} parent=39 // pred_region
        %s1262 = smul.u32 64, %s15
        %p1263 = scmp.lt.s32.totalorder %s1262, 255
        %s1264 = scalar_select %p1263, %s1262, 255
        %s1265 = smul.addr %s1264, 4
        %s1266 = scalar_lea.vmem %s3, %s1265
      $region44: #{tpu_custom_call.1} parent=39 // pred_fallthru
        _
    $region40: #{tpu_custom_call.1} parent=5 // pred_fallthru
      _
  $region6: #{tpu_custom_call.1} parent=0 // loop_footer
    %s13 = sadd.s32 1, %s9
  $region7: #{tpu_custom_call.1} parent=0 // loop_footer_branch
    %8 = sbr.rel target = $region3
  $region8: #{tpu_custom_call.1} parent=0 // loop_exit
    _

</llo_original>
